<compile_context>
chip_gen: v6e
topology: v6e:2x2x1
jax: 0.10.0
libtpu: 0.0.40
codegen_flags: <defaults>
</compile_context>

<pallas_src>
import functools

import numpy as np
import jax
import jax.numpy as jnp
from jax import lax
from jax.experimental import pallas as pl
from jax.experimental.pallas import tpu as pltpu


# ---------------------------------------------------------------------------
# Weight-matrix construction (host-side glue; mirrors kornia resize with
# antialias=True: gaussian blur w/ reflect pad, then bilinear, align_corners=False)
# ---------------------------------------------------------------------------
def _gaussian_kernel1d(ks, sigma):
    x = np.arange(ks, dtype=np.float64) - ks // 2
    if ks % 2 == 0:
        x = x + 0.5
    g = np.exp(-(x ** 2) / (2.0 * sigma ** 2))
    return g / g.sum()


def _reflect_index(idx, n):
    # torch 'reflect' padding (no edge repeat), handles repeated reflection
    if n == 1:
        return 0
    period = 2 * (n - 1)
    idx = idx % period
    if idx < 0:
        idx += period
    if idx >= n:
        idx = period - idx
    return idx


def _blur_matrix(n, sigma):
    # kornia: ks = int(max(2 * 2 * sigma, 3)), gaussian_blur2d with reflect pad
    ks = int(max(2.0 * 2.0 * sigma, 3.0))
    g = _gaussian_kernel1d(ks, sigma)
    pad_front = (ks - 1) // 2
    G = np.zeros((n, n), dtype=np.float64)
    for i in range(n):
        for t in range(ks):
            j = _reflect_index(i + t - pad_front, n)
            G[i, j] += g[t]
    return G


def _bilinear_matrix(n_out, n_in):
    # F.interpolate(mode='bilinear', align_corners=False), one axis
    scale = n_in / n_out
    B = np.zeros((n_out, n_in), dtype=np.float64)
    for i in range(n_out):
        src = (i + 0.5) * scale - 0.5
        x0 = int(np.floor(src))
        frac = src - x0
        i0 = min(max(x0, 0), n_in - 1)
        i1 = min(max(x0 + 1, 0), n_in - 1)
        B[i, i0] += 1.0 - frac
        B[i, i1] += frac
    return B


@functools.lru_cache(maxsize=None)
def _resize_weights_np(in_h, in_w, out_h, out_w, antialias):
    fh = in_h / out_h
    fw = in_w / out_w
    Wh = _bilinear_matrix(out_h, in_h)
    Ww = _bilinear_matrix(out_w, in_w)
    if antialias and max(fh, fw) > 1.0:
        sh = max((fh - 1.0) / 2.0, 0.001)
        sw = max((fw - 1.0) / 2.0, 0.001)
        Wh = Wh @ _blur_matrix(in_h, sh)
        Ww = Ww @ _blur_matrix(in_w, sw)
    return Wh.astype(np.float32), Ww.astype(np.float32)


# Device-side weight cache: avoids per-call host rebuild + H2D upload.
_WEIGHT_CACHE = {}


def _get_device_weights(in_h, in_w, out_h, out_w, antialias, out_wp):
    key = (in_h, in_w, out_h, out_w, bool(antialias), out_wp)
    hit = _WEIGHT_CACHE.get(key)
    if hit is not None:
        return hit
    wh_np, ww_np = _resize_weights_np(in_h, in_w, out_h, out_w, bool(antialias))
    wwt_np = np.zeros((in_w, out_wp), dtype=np.float32)
    wwt_np[:, :out_w] = ww_np.T
    wh = jnp.asarray(wh_np, dtype=jnp.bfloat16)      # (out_h, in_h)
    wwt = jnp.asarray(wwt_np, dtype=jnp.bfloat16)    # (in_w, out_wp)
    _WEIGHT_CACHE[key] = (wh, wwt)
    return wh, wwt


# ---------------------------------------------------------------------------
# Sizing helpers (generation-aware VMEM budgeting, plane-group selection)
# ---------------------------------------------------------------------------
def _round_up(x, m):
    return -(-x // m) * m


def _vmem_capacity_bytes():
    try:
        return int(pltpu.get_tpu_info().vmem_capacity_bytes)
    except Exception:
        return 64 * 1024 * 1024   # conservative floor (v7x); v5e/v6e have 128 MiB


def _step_vmem_bytes(b, in_h, in_w, out_h, out_wp):
    # double-buffered f32 x / y blocks
    x_blk = 2 * 4 * b * in_h * in_w
    y_blk = 2 * 4 * b * out_h * out_wp
    # bf16 weights (default double-buffered; tiny now that the kron is gone)
    wgt = 2 * 2 * (out_h * in_h + in_w * out_wp)
    # per-plane compute temporaries: bf16 X copy, f32 + bf16 intermediate, f32 Y
    tmp = 2 * in_h * in_w + 6 * in_h * out_wp + 4 * out_h * out_wp
    return x_blk + y_blk + wgt + tmp


def _choose_planes_per_group(nc, in_h, in_w, out_h, out_wp, budget):
    """Return (planes folded per grid step B, number of grid steps G)."""
    base = _step_vmem_bytes(0, in_h, in_w, out_h, out_wp)
    per_plane = max(1, _step_vmem_bytes(1, in_h, in_w, out_h, out_wp) - base)
    b = max(1, (budget - base) // per_plane)
    b = int(min(nc, b))
    if nc >= 2:
        # keep >= 2 "parallel" grid steps so v7x's two TensorCores both work;
        # neutral on single-TC v5e/v6e.
        b = min(b, -(-nc // 2))
    b = max(1, b)
    g = -(-nc // b)
    return int(b), int(g)


# ---------------------------------------------------------------------------
# Pallas kernel: per plane  Y_i = W_h @ (X_i @ W_w^T)   (+ optional quantize)
# ---------------------------------------------------------------------------
def _resize_kernel(wh_ref, x_ref, wwt_ref, o_ref, *, quantize):
    # wh_ref : (out_h, in_h)    bf16, shared across grid steps
    # x_ref  : (B, in_h, in_w)  f32 plane block
    # wwt_ref: (in_w, out_wp)   bf16, shared
    # o_ref  : (B, out_h, out_wp)
    wh = wh_ref[...]
    wwt = wwt_ref[...]
    planes = x_ref.shape[0]

    def body(i, carry):
        xb = x_ref[i].astype(jnp.bfloat16)                                   # (in_h, in_w)
        t = jnp.dot(xb, wwt, preferred_element_type=jnp.float32)             # width pass
        y = jnp.dot(wh, t.astype(jnp.bfloat16),
                    preferred_element_type=jnp.float32)                      # height pass
        if quantize:
            # torch: clamp(0,255).type(uint8).type(float) -> truncation == floor (y>=0)
            y = jnp.floor(jnp.clip(y, 0.0, 255.0))
        o_ref[i] = y.astype(o_ref.dtype)
        return carry

    lax.fori_loop(0, planes, body, 0)


def resize(x, size, quantize, antialias=True):
    """x: (N, C, H, W) float32 -> (N, C, out_h, out_w) float32."""
    n, c, in_h, in_w = x.shape
    out_h, out_w = size
    nc = n * c

    # Lane-dense stores: pad the output width to a multiple of 128 only when
    # the extra MXU work is modest (<= 1.3x); tiny widths stay unpadded.
    out_wp_full = _round_up(out_w, 128)
    out_wp = out_wp_full if out_wp_full * 10 <= out_w * 13 else out_w

    wh, wwt = _get_device_weights(in_h, in_w, out_h, out_w, antialias, out_wp)

    cap = _vmem_capacity_bytes()
    budget = int(0.42 * cap)                    # ~27 MiB on v7x, ~54 MiB on v5e/v6e
    b, g = _choose_planes_per_group(nc, in_h, in_w, out_h, out_wp, budget)
    ncp = b * g

    # Natural NCHW plane view — free reshape, no transposes / extra HBM passes.
    x_planes = x.reshape(nc, in_h, in_w)
    if ncp != nc:
        x_planes = jnp.pad(x_planes, ((0, ncp - nc), (0, 0), (0, 0)))

    vmem_need = _step_vmem_bytes(b, in_h, in_w, out_h, out_wp)
    vmem_limit = int(min(max(4 << 20, vmem_need + (2 << 20)), cap))

    cost = pl.CostEstimate(
        flops=int(2 * ncp * (in_h * in_w * out_wp + out_h * in_h * out_wp)),
        transcendentals=0,
        bytes_accessed=int(4 * ncp * (in_h * in_w + out_h * out_wp)
                           + 2 * (out_h * in_h + in_w * out_wp)),
    )

    kern = functools.partial(_resize_kernel, quantize=quantize)

    out = pl.pallas_call(
        kern,
        out_shape=jax.ShapeDtypeStruct((ncp, out_h, out_wp), x.dtype),
        grid_spec=pltpu.PrefetchScalarGridSpec(
            num_scalar_prefetch=0,
            grid=(g,),
            in_specs=[
                pl.BlockSpec((out_h, in_h), lambda i: (0, 0)),        # W_h (shared)
                pl.BlockSpec((b, in_h, in_w), lambda i: (i, 0, 0)),   # plane block
                pl.BlockSpec((in_w, out_wp), lambda i: (0, 0)),       # W_w^T (shared)
            ],
            out_specs=pl.BlockSpec((b, out_h, out_wp), lambda i: (i, 0, 0)),
        ),
        compiler_params=pltpu.CompilerParams(
            dimension_semantics=("parallel",),
            vmem_limit_bytes=vmem_limit,
        ),
        cost_estimate=cost,
    )(wh, x_planes, wwt)

    out = out[:nc, :, :out_w].reshape(n, c, out_h, out_w)
    return out


# ---------------------------------------------------------------------------
# Pure-JAX f32 reference (same fused weight matrices) for validation
# ---------------------------------------------------------------------------
def _resize_reference(x, size, quantize, antialias=True):
    _, _, in_h, in_w = x.shape
    out_h, out_w = size
    wh_np, ww_np = _resize_weights_np(in_h, in_w, out_h, out_w, bool(antialias))
    y = jnp.einsum("oh,nchw,vw->ncov", jnp.asarray(wh_np), x, jnp.asarray(ww_np),
                   precision=jax.lax.Precision.HIGHEST)
    if quantize:
        y = jnp.floor(jnp.clip(y, 0.0, 255.0))
    return y


if __name__ == "__main__":
    key = jax.random.PRNGKey(0)
    k1, k2 = jax.random.split(key)

    # Case 1: module's typical use — small image batch, quantized output.
    x = jax.random.uniform(k1, (2, 4, 16, 16), dtype=jnp.float32) * 255.0
    y = resize(x, size=(8, 8), quantize=True)
    jax.block_until_ready(y)

    assert y.shape == (2, 4, 8, 8)
    assert y.dtype == jnp.float32
    # quantized outputs must be integers in [0, 255]
    assert bool(jnp.all(y == jnp.floor(y)))
    assert bool(jnp.all((y >= 0) & (y <= 255)))
    y_ref = _resize_reference(x, (8, 8), quantize=True)
    # bf16 MXU operands + floor boundaries: allow up to 2 LSB of the uint8 grid
    assert float(jnp.max(jnp.abs(y - y_ref))) <= 2.0

    # Case 2: exercises the multi-group grid path (grid > 1), no quantization.
    x2 = jax.random.uniform(k2, (4, 8, 16, 16), dtype=jnp.float32) * 255.0
    y2 = resize(x2, size=(8, 8), quantize=False)
    jax.block_until_ready(y2)
    assert y2.shape == (4, 8, 8, 8)
    y2_ref = _resize_reference(x2, (8, 8), quantize=False)
    # bf16 compute vs f32 reference on values up to 255: <= ~0.8% absolute
    assert float(jnp.max(jnp.abs(y2 - y2_ref))) <= 2.0

    print("KERNEL_OK")
</pallas_src>

<mosaic_0001>
module attributes {stable_mosaic.version = 11 : i64} {
  func.func @_resize_kernel(%arg0: i32, %arg1: memref<8x16xbf16, #tpu.memory_space<vmem>>, %arg2: memref<4x16x16xf32, #tpu.memory_space<vmem>>, %arg3: memref<16x8xbf16, #tpu.memory_space<vmem>>, %arg4: memref<4x8x8xf32, #tpu.memory_space<vmem>>) attributes {dimension_semantics = [#tpu.dimension_semantics<parallel>], iteration_bounds = array<i64: 2>, scalar_prefetch = 0 : i64, scratch_operands = 0 : i64, tpu.core_type = #tpu.core_type<tc>, window_params = [{pipeline_mode = #tpu.pipeline_mode<synchronous>, transform_indices = @transform_0, window_bounds = array<i64: 8, 16>}, {transform_indices = @transform_1, window_bounds = array<i64: 4, 16, 16>}, {pipeline_mode = #tpu.pipeline_mode<synchronous>, transform_indices = @transform_2, window_bounds = array<i64: 16, 8>}, {transform_indices = @transform_3, window_bounds = array<i64: 4, 8, 8>}]} {
    %c0 = arith.constant 0 : index
    %c0_0 = arith.constant 0 : index
    %0 = vector.load %arg1[%c0, %c0_0] : memref<8x16xbf16, #tpu.memory_space<vmem>>, vector<8x16xbf16>
    %c0_1 = arith.constant 0 : index
    %c0_2 = arith.constant 0 : index
    %1 = vector.load %arg3[%c0_1, %c0_2] : memref<16x8xbf16, #tpu.memory_space<vmem>>, vector<16x8xbf16>
    %c0_i32 = arith.constant 0 : i32
    %c4_i32 = arith.constant 4 : i32
    %2 = arith.addi %c0_i32, %c4_i32 : i32
    %c1_i32 = arith.constant 1 : i32
    scf.for %arg5 = %c0_i32 to %2 step %c1_i32  : i32 {
      %3 = arith.index_cast %arg5 : i32 to index
      %c0_4 = arith.constant 0 : index
      %c0_5 = arith.constant 0 : index
      %4 = vector.load %arg2[%3, %c0_4, %c0_5] : memref<4x16x16xf32, #tpu.memory_space<vmem>>, vector<1x16x16xf32>
      %5 = vector.shape_cast %4 : vector<1x16x16xf32> to vector<16x16xf32>
      %6 = arith.truncf %5 : vector<16x16xf32> to vector<16x16xbf16>
      %cst = arith.constant dense<0.000000e+00> : vector<16x8xf32>
      %7 = tpu.matmul %6, %1, %cst {dimension_numbers = #tpu.dot_dimension_numbers<[1], [0], [0], [1], [0, 0, 1, 1], [], []>} : vector<16x16xbf16>, vector<16x8xbf16>, vector<16x8xf32> -> vector<16x8xf32>
      %8 = arith.truncf %7 : vector<16x8xf32> to vector<16x8xbf16>
      %cst_6 = arith.constant dense<0.000000e+00> : vector<8x8xf32>
      %9 = tpu.matmul %0, %8, %cst_6 {dimension_numbers = #tpu.dot_dimension_numbers<[1], [0], [0], [1], [0, 0, 1, 1], [], []>} : vector<8x16xbf16>, vector<16x8xbf16>, vector<8x8xf32> -> vector<8x8xf32>
      %cst_7 = arith.constant 0.000000e+00 : f32
      %cst_8 = arith.constant 2.550000e+02 : f32
      %10 = vector.broadcast %cst_7 : f32 to vector<8x8xf32>
      %11 = arith.maximumf %10, %9 : vector<8x8xf32>
      %12 = vector.broadcast %cst_8 : f32 to vector<8x8xf32>
      %13 = arith.minimumf %12, %11 : vector<8x8xf32>
      %14 = math.floor %13 : vector<8x8xf32>
      %15 = arith.index_cast %arg5 : i32 to index
      %c0_9 = arith.constant 0 : index
      %c0_10 = arith.constant 0 : index
      %16 = vector.load %arg4[%15, %c0_9, %c0_10] : memref<4x8x8xf32, #tpu.memory_space<vmem>>, vector<1x8x8xf32>
      %17 = vector.shape_cast %16 : vector<1x8x8xf32> to vector<8x8xf32>
      %18 = vector.shape_cast %14 : vector<8x8xf32> to vector<1x8x8xf32>
      tpu.vector_store %arg4[%15, %c0_9, %c0_10], %18 {strides = array<i32>} : memref<4x8x8xf32, #tpu.memory_space<vmem>>, vector<1x8x8xf32>,
    }
    %c4_i32_3 = arith.constant 4 : i32
    return
  }
  func.func @transform_0(%arg0: i32) -> (i32, i32) {
    %c0_i32 = arith.constant 0 : i32
    %c0_i32_0 = arith.constant 0 : i32
    %c0_i32_1 = arith.constant 0 : i32
    return %c0_i32, %c0_i32_0 : i32, i32
  }
  func.func @transform_1(%arg0: i32) -> (i32, i32, i32) {
    %c0_i32 = arith.constant 0 : i32
    %c0_i32_0 = arith.constant 0 : i32
    %c0_i32_1 = arith.constant 0 : i32
    return %arg0, %c0_i32, %c0_i32_0 : i32, i32, i32
  }
  func.func @transform_2(%arg0: i32) -> (i32, i32) {
    %c0_i32 = arith.constant 0 : i32
    %c0_i32_0 = arith.constant 0 : i32
    %c0_i32_1 = arith.constant 0 : i32
    return %c0_i32, %c0_i32_0 : i32, i32
  }
  func.func @transform_3(%arg0: i32) -> (i32, i32, i32) {
    %c0_i32 = arith.constant 0 : i32
    %c0_i32_0 = arith.constant 0 : i32
    %c0_i32_1 = arith.constant 0 : i32
    return %arg0, %c0_i32, %c0_i32_0 : i32, i32, i32
  }
}

</mosaic_0001>

<llo_original>
// kernel: tpu_custom_call.1
$region0: #{tpu_custom_call.1}
  #allocation0 [shape = 'u32[]', space=smem, size = 0x4, offset = 0x4, fixed_abs, tag = 'smem constant byte address 0x4 - core index']
  #allocation1 [shape = 'u32[144,128]{1,0:T(1,128)}', space=vmem, size = 0x12000, scoped, tag = 'internal scratch']
  %s0 = inlined_call_operand.vmem [shape: bf16[8,16], index: 0, kind: input, shape index: {}]
  %s1 = inlined_call_operand.hbm [shape: f32[8,16,16], index: 1, kind: input, shape index: {}]
  %s2 = inlined_call_operand.vmem [shape: bf16[16,8], index: 2, kind: input, shape index: {}]
  %s3 = inlined_call_operand.hbm [shape: f32[8,8,8], index: 3, kind: output, shape index: {}]
  %s4 = sld [smem:[#allocation0]]
  $region56: #{tpu_custom_call.1} parent=0
    _
  %s6 = ssub.s32 1, %s4
  %s7 = scalar_select 0, %s6, %s4
  $region1: #{tpu_custom_call.1} parent=0
    #allocation2 [shape = 'u8[65536]{0}', space=vmem, size = 0x10000, scoped, tag = 'input window, operand 1']
    #allocation3 [shape = 's32[2]{0}', space=sflag, size = 0x8, scoped, tag = 'scoped memory for tpu_custom_call.1']
    #allocation4 [shape = 's32[2]{0}', space=sflag, size = 0x8, scoped, tag = 'scoped memory for tpu_custom_call.1']
    #allocation5 [shape = 'u8[32768]{0}', space=vmem, size = 0x8000, scoped, tag = 'output window, operand 0']
    %8 = vsyncpa [#allocation3], 0
    %s9 = scalar_lea.sflag [#allocation3], 1
    %10 = vsyncpa %s9, 0
    %11 = vsyncpa [#allocation4], 0
    %s12 = scalar_lea.sflag [#allocation4], 1
    %13 = vsyncpa %s12, 0
    loop: start=0, step=1, limit=4
    $region2: #{tpu_custom_call.1} parent=1 // loop_pre_header
      _
    $region3: #{tpu_custom_call.1} parent=1 // loop_header
      %s15 = sphi 0, %s19
      %p16 = scmp.ge.s32.totalorder %s15, 4
      %s23 = sphi 0, %s23
      %s25 = sphi 0, %s23
      %s26 = sphi 0, %s25
      %s40 = sphi 0, %s26
      %s46 = sphi 0, %s48
      %s49 = sphi 0, %s46
      %s50 = sphi 0, %s49
      %s66 = sphi 0, %s50
      %s70 = sphi 0, %s70
      %s72 = sphi 0, %s70
      %s73 = sphi 0, %s72
      %s87 = sphi 0, %s73
      %s93 = sphi 0, %s95
      %s96 = sphi 0, %s93
      %s97 = sphi 0, %s96
      %s113 = sphi 0, %s97
    $region4: #{tpu_custom_call.1} parent=1 // loop_header_branch
      %18 = sbr.rel (%p16) target = $region8
    $region5: #{tpu_custom_call.1} parent=1 // loop_body
      %s20 = ssub.s32 %s15, 1
      %s21 = ssub.s32 %s15, 2
      %s22 = sadd.s32 %s15, 1
      %s24 = sadd.s32 %s23, 1
      %p27 = scmp.eq.s32.totalorder %s15, 1
      %p28 = scmp.ne.s32.totalorder %s23, %s25
      %p29 = scmp.eq.s32.totalorder %s15, 0
      %p30 = por %p28, %p29
      %p31 = scmp.ne.s32.totalorder %s23, %s25
      %p32 = scmp.eq.s32.totalorder %s20, 1
      %p33 = por %p31, %p32
      %p34 = scmp.ne.s32.totalorder %s25, %s26
      %p35 = scmp.eq.s32.totalorder %s20, 0
      %p36 = por %p34, %p35
      %p37 = scmp.ne.s32.totalorder %s25, %s26
      %p38 = scmp.eq.s32.totalorder %s21, 1
      %p39 = por %p37, %p38
      %p41 = scmp.ne.s32.totalorder %s26, %s40
      %p42 = scmp.eq.s32.totalorder %s21, 0
      %p43 = por %p41, %p42
      %s44 = ssub.s32 %s15, %s22
      %p45 = scmp.eq.s32.totalorder %s44, 0
      %s47 = sadd.s32 %s46, 1
      %s48 = scalar_select %p45, %s46, %s47
      %p51 = pneg %p45
      %p52 = scmp.eq.s32.totalorder %s15, 1
      %p53 = por %p51, %p52
      %p54 = scmp.ne.s32.totalorder %s46, %s49
      %p55 = scmp.eq.s32.totalorder %s15, 0
      %p56 = por %p54, %p55
      %p57 = scmp.ne.s32.totalorder %s46, %s49
      %p58 = scmp.eq.s32.totalorder %s20, 1
      %p59 = por %p57, %p58
      %p60 = scmp.ne.s32.totalorder %s49, %s50
      %p61 = scmp.eq.s32.totalorder %s20, 0
      %p62 = por %p60, %p61
      %p63 = scmp.ne.s32.totalorder %s49, %s50
      %p64 = scmp.eq.s32.totalorder %s21, 1
      %p65 = por %p63, %p64
      %p67 = scmp.ne.s32.totalorder %s50, %s66
      %p68 = scmp.eq.s32.totalorder %s21, 0
      %p69 = por %p67, %p68
      %s71 = sadd.s32 %s70, 1
      %p74 = scmp.eq.s32.totalorder %s15, 1
      %p75 = scmp.ne.s32.totalorder %s70, %s72
      %p76 = scmp.eq.s32.totalorder %s15, 0
      %p77 = por %p75, %p76
      %p78 = scmp.ne.s32.totalorder %s70, %s72
      %p79 = scmp.eq.s32.totalorder %s20, 1
      %p80 = por %p78, %p79
      %p81 = scmp.ne.s32.totalorder %s72, %s73
      %p82 = scmp.eq.s32.totalorder %s20, 0
      %p83 = por %p81, %p82
      %p84 = scmp.ne.s32.totalorder %s72, %s73
      %p85 = scmp.eq.s32.totalorder %s21, 1
      %p86 = por %p84, %p85
      %p88 = scmp.ne.s32.totalorder %s73, %s87
      %p89 = scmp.eq.s32.totalorder %s21, 0
      %p90 = por %p88, %p89
      %s91 = ssub.s32 %s15, %s22
      %p92 = scmp.eq.s32.totalorder %s91, 0
      %s94 = sadd.s32 %s93, 1
      %s95 = scalar_select %p92, %s93, %s94
      %p98 = pneg %p92
      %p99 = scmp.eq.s32.totalorder %s15, 1
      %p100 = por %p98, %p99
      %p101 = scmp.ne.s32.totalorder %s93, %s96
      %p102 = scmp.eq.s32.totalorder %s15, 0
      %p103 = por %p101, %p102
      %p104 = scmp.ne.s32.totalorder %s93, %s96
      %p105 = scmp.eq.s32.totalorder %s20, 1
      %p106 = por %p104, %p105
      %p107 = scmp.ne.s32.totalorder %s96, %s97
      %p108 = scmp.eq.s32.totalorder %s20, 0
      %p109 = por %p107, %p108
      %p110 = scmp.ne.s32.totalorder %s96, %s97
      %p111 = scmp.eq.s32.totalorder %s21, 1
      %p112 = por %p110, %p111
      %p114 = scmp.ne.s32.totalorder %s97, %s113
      %p115 = scmp.eq.s32.totalorder %s21, 0
      %p116 = por %p114, %p115
      %p117 = scmp.le.s32.totalorder 1, %s15
      %p118 = scmp.lt.s32.totalorder %s15, 3
      %p119 = pnand %p117, %p118
      %p120 = pneg %p119
      // Predicated region
      $region9: #{tpu_custom_call.1} parent=5 // pred_check
        _
      $region10: #{tpu_custom_call.1} parent=5 // pred_check_branch
        %122 = sbr.rel (%p119) target = $region12
      $region11: #{tpu_custom_call.1} parent=5 // pred_region
        %s123 = ssub.s32 %s15, 1
        // Predicated region
        $region13: #{tpu_custom_call.1} parent=11 // pred_check
          %p124 = pneg %p36
        $region14: #{tpu_custom_call.1} parent=11 // pred_check_branch
          %126 = sbr.rel (%p124) target = $region16
        $region15: #{tpu_custom_call.1} parent=11 // pred_region
          _
        $region16: #{tpu_custom_call.1} parent=11 // pred_fallthru
          _
        // Predicated region
        $region17: #{tpu_custom_call.1} parent=11 // pred_check
          %p127 = pneg %p83
        $region18: #{tpu_custom_call.1} parent=11 // pred_check_branch
          %129 = sbr.rel (%p127) target = $region20
        $region19: #{tpu_custom_call.1} parent=11 // pred_region
          _
        $region20: #{tpu_custom_call.1} parent=11 // pred_fallthru
          _
      $region12: #{tpu_custom_call.1} parent=5 // pred_fallthru
        _
      %p130 = scmp.lt.s32.totalorder %s15, 2
      // Predicated region
      $region21: #{tpu_custom_call.1} parent=5 // pred_check
        %p131 = pneg %p130
      $region22: #{tpu_custom_call.1} parent=5 // pred_check_branch
        %133 = sbr.rel (%p131) target = $region24
      $region23: #{tpu_custom_call.1} parent=5 // pred_region
        // Predicated region
        $region25: #{tpu_custom_call.1} parent=23 // pred_check
          %p134 = pneg %p56
        $region26: #{tpu_custom_call.1} parent=23 // pred_check_branch
          %136 = sbr.rel (%p134) target = $region28
        $region27: #{tpu_custom_call.1} parent=23 // pred_region
          %s137 = sand.u32 %s46, 1
          %s138 = scalar_lea.sflag [#allocation3], %s137
          %s139 = sand.u32 %s46, 1
          %s140 = smul.addr %s139, 64
          %s141 = scalar_lea.vmem [#allocation2], %s140
          %s142 = smul.u32 4, %s15
          %s144 = ssub.s32 1024, 1024
          %145 = vsyncadd %s138, %s144
          %s146 = smul.addr %s142, 2
          %s147 = smul.addr %s146, 128
          %s148 = scalar_lea.hbm %s1, %s147
          %s149 = sshll.u32 %s141, 4
          %s150 = int_to_ptr.vmem [resolvable:$true] %s149
          %155 = dma.hbm_to_vmem [thread:$0]  %s148, 1024, %s150, %s138, 128, 128, 8
        $region28: #{tpu_custom_call.1} parent=23 // pred_fallthru
          _
      $region24: #{tpu_custom_call.1} parent=5 // pred_fallthru
        _
      %p156 = scmp.le.s32.totalorder 1, %s15
      %p157 = scmp.lt.s32.totalorder %s15, 3
      %p158 = pnand %p156, %p157
      %p159 = pneg %p158
      // Predicated region
      $region29: #{tpu_custom_call.1} parent=5 // pred_check
        _
      $region30: #{tpu_custom_call.1} parent=5 // pred_check_branch
        %161 = sbr.rel (%p158) target = $region32
      $region31: #{tpu_custom_call.1} parent=5 // pred_region
        %s162 = ssub.s32 %s15, 1
        %s163 = sand.u32 %s49, 1
        %s164 = scalar_lea.sflag [#allocation3], %s163
        %s165 = sand.u32 %s49, 1
        %s166 = smul.addr %s165, 64
        %s167 = scalar_lea.vmem [#allocation2], %s166
        // Predicated region
        $region33: #{tpu_custom_call.1} parent=31 // pred_check
          %p168 = pneg %p62
        $region34: #{tpu_custom_call.1} parent=31 // pred_check_branch
          %170 = sbr.rel (%p168) target = $region36
        $region35: #{tpu_custom_call.1} parent=31 // pred_region
          %171 = dma.done %s164, 1024
        $region36: #{tpu_custom_call.1} parent=31 // pred_fallthru
          _
        %p172 = pneg %p36
        %p173 = pneg %p33
        %s174 = sand.u32 %s49, 1
        %s175 = scalar_lea.sflag [#allocation3], %s174
        %s176 = sand.u32 %s49, 1
        %s177 = smul.addr %s176, 64
        %s178 = scalar_lea.vmem [#allocation2], %s177
        %p179 = pneg %p62
        %p180 = pneg %p59
        %p181 = pneg %p83
        %p182 = pneg %p80
        %p183 = pneg %p109
        %p184 = pneg %p106
        %s185 = sand.u32 %s96, 1
        %s186 = scalar_lea.sflag [#allocation4], %s185
        %s187 = sand.u32 %s96, 1
        %s188 = smul.addr %s187, 32
        %s189 = scalar_lea.vmem [#allocation5], %s188
        %s190 = smul.u32 4, %s20
        %s191 = smul.u32 4, %s20
        %v193 = vld [vmem:[%s0] sm:$0xf]
        %v194 = vld [vmem:[%s2] sm:$0xf]
        %v195 = vld [vmem:[%s2 + $0x4] sm:$0xf]
        loop: start=0, step=1, limit=4
        $region37: #{tpu_custom_call.1} parent=31 // loop_pre_header
          _
        $region38: #{tpu_custom_call.1} parent=31 // loop_header
          %s197 = sphi 0, %s201
          %p198 = scmp.ge.s32.totalorder %s197, 4
        $region39: #{tpu_custom_call.1} parent=31 // loop_header_branch
          %200 = sbr.rel (%p198) target = $region43
        $region40: #{tpu_custom_call.1} parent=31 // loop_body
          %s202 = smul.u32 %s197, 16
          %s203 = scalar_lea.vmem %s167, %s202 [#allocation2]
          %v204 = vld [vmem:[%s203] sm:$0xff]
          %v205 = vld [vmem:[%s203 + $0x8] sm:$0xff]
          %v206 = vpack.c.bf16 %v205, %v204
          %v209 = vunpack.c.l.b16 %v194
          %v210 = vunpack.c.l.b16 %v195
          %v211 = vpack.c.b16 %v210, %v209
          %vm213 = vcmask 130048
          %v215 = vsel %vm213, %v206, 0
          %217 = vmatprep.subr.bf16.mxu0 0
          %218 = vmatpush1.bf16.msra.mxu0 0
          %219 = vmatprep.subr.bf16.mxu0 0
          %220 = vmatpush1.bf16.msra.mxu0 0
          %221 = vmatprep.subr.bf16.mxu0 0
          %222 = vmatpush1.bf16.msra.mxu0 0
          %223 = vmatprep.subr.bf16.mxu0 0
          %224 = vmatpush1.bf16.msra.mxu0 0
          %225 = vmatprep.subr.bf16.mxu0 0
          %226 = vmatpush1.bf16.msra.mxu0 0
          %227 = vmatprep.subr.bf16.mxu0 0
          %228 = vmatpush1.bf16.msra.mxu0 0
          %229 = vmatprep.subr.bf16.mxu0 0
          %230 = vmatpush1.bf16.msra.mxu0 0
          %231 = vmatprep.subr.bf16.mxu0 0
          %232 = vmatpush1.bf16.msra.mxu0 %v211
          %233 = vmatprep.subr.bf16.mxu0 0
          %234 = vmatpush2.bf16.msra.mxu0 0
          %235 = vmatprep.subr.bf16.mxu0 0
          %236 = vmatpush2.bf16.msra.mxu0 0
          %237 = vmatprep.subr.bf16.mxu0 0
          %238 = vmatpush2.bf16.msra.mxu0 0
          %239 = vmatprep.subr.bf16.mxu0 0
          %240 = vmatpush2.bf16.msra.mxu0 0
          %241 = vmatprep.subr.bf16.mxu0 0
          %242 = vmatpush2.bf16.msra.mxu0 0
          %243 = vmatprep.subr.bf16.mxu0 0
          %244 = vmatpush2.bf16.msra.mxu0 0
          %245 = vmatprep.subr.bf16.mxu0 0
          %246 = vmatpush2.bf16.msra.mxu0 0
          %247 = vmatprep.subr.bf16.mxu0 0
          %248 = vmatpush2.bf16.msra.mxu0 0
          %249 = vmatprep.mubr.bf16.mxu0 0
          %250 = vmatmul.mubr.bf16.gmra.mxu0 %v215
          %v251 = vpop.f32.mrf.mxu0
          %v252 = vadd.f32 0.0, %v251
          %v253 = vpop.f32.mrf.mxu0
          %v254 = vpop.f32.mrf.mxu0
          %v255 = vadd.f32 0.0, %v254
          %v256 = vpop.f32.mrf.mxu0
          %257 = vdwg.mxu0
          %v258 = vpack.c.bf16 %v255, %v252
          %v260 = vsel %vm213, %v193, 0
          %262 = vmatprep.subr.bf16.mxu0 0
          %263 = vmatpush1.bf16.msra.mxu0 0
          %264 = vmatprep.subr.bf16.mxu0 0
          %265 = vmatpush1.bf16.msra.mxu0 0
          %266 = vmatprep.subr.bf16.mxu0 0
          %267 = vmatpush1.bf16.msra.mxu0 0
          %268 = vmatprep.subr.bf16.mxu0 0
          %269 = vmatpush1.bf16.msra.mxu0 0
          %270 = vmatprep.subr.bf16.mxu0 0
          %271 = vmatpush1.bf16.msra.mxu0 0
          %272 = vmatprep.subr.bf16.mxu0 0
          %273 = vmatpush1.bf16.msra.mxu0 0
          %274 = vmatprep.subr.bf16.mxu0 0
          %275 = vmatpush1.bf16.msra.mxu0 0
          %276 = vmatprep.subr.bf16.mxu0 0
          %277 = vmatpush1.bf16.msra.mxu0 %v258
          %278 = vmatprep.subr.bf16.mxu0 0
          %279 = vmatpush2.bf16.msra.mxu0 0
          %280 = vmatprep.subr.bf16.mxu0 0
          %281 = vmatpush2.bf16.msra.mxu0 0
          %282 = vmatprep.subr.bf16.mxu0 0
          %283 = vmatpush2.bf16.msra.mxu0 0
          %284 = vmatprep.subr.bf16.mxu0 0
          %285 = vmatpush2.bf16.msra.mxu0 0
          %286 = vmatprep.subr.bf16.mxu0 0
          %287 = vmatpush2.bf16.msra.mxu0 0
          %288 = vmatprep.subr.bf16.mxu0 0
          %289 = vmatpush2.bf16.msra.mxu0 0
          %290 = vmatprep.subr.bf16.mxu0 0
          %291 = vmatpush2.bf16.msra.mxu0 0
          %292 = vmatprep.subr.bf16.mxu0 0
          %293 = vmatpush2.bf16.msra.mxu0 0
          %294 = vmatprep.mubr.bf16.mxu0 0
          %295 = vmatmul.mubr.bf16.gmra.mxu0 %v260
          %v296 = vpop.f32.mrf.mxu0
          %v297 = vadd.f32 0.0, %v296
          %v298 = vpop.f32.mrf.mxu0
          %v299 = vpop.f32.mrf.mxu0
          %v300 = vpop.f32.mrf.mxu0
          %301 = vdwg.mxu0
          %v302 = vmax.f32 %v297, 0.0
          %v303 = vmin.f32 %v302, 255.0
          %v304 = vfloor.f32 %v303
          %s305 = smul.u32 %s197, 8
          %s306 = scalar_lea.vmem %s189, %s305 [#allocation5]
          %vm307 = vcmask 64512
          %308 = vst.msk [vmem:[%s306] sm:$0xff] %vm307, %v304
        $region41: #{tpu_custom_call.1} parent=31 // loop_footer
          %s201 = sadd.s32 1, %s197
        $region42: #{tpu_custom_call.1} parent=31 // loop_footer_branch
          %196 = sbr.rel target = $region38
        $region43: #{tpu_custom_call.1} parent=31 // loop_exit
          _
        %s309 = sand.u32 %s96, 1
        %s310 = scalar_lea.sflag [#allocation4], %s309
        %s311 = sand.u32 %s96, 1
        %s312 = smul.addr %s311, 32
        %s313 = scalar_lea.vmem [#allocation5], %s312
        // Predicated region
        $region44: #{tpu_custom_call.1} parent=31 // pred_check
          %p314 = pneg %p106
        $region45: #{tpu_custom_call.1} parent=31 // pred_check_branch
          %316 = sbr.rel (%p314) target = $region47
        $region46: #{tpu_custom_call.1} parent=31 // pred_region
          %s317 = smul.u32 4, %s20
          %s319 = ssub.s32 512, 512
          %320 = vsyncadd %s310, %s319
          %s321 = smul.addr %s317, 128
          %s322 = scalar_lea.hbm %s3, %s321
          %s323 = sshll.u32 %s313, 4
          %s324 = int_to_ptr.vmem [resolvable:$true] %s323
          %329 = dma.vmem_to_hbm [thread:$0]  %s324, 512, %s322, %s310, 128, 128, 8
        $region47: #{tpu_custom_call.1} parent=31 // pred_fallthru
          _
      $region32: #{tpu_custom_call.1} parent=5 // pred_fallthru
        _
      %p330 = scmp.le.s32.totalorder 2, %s15
      // Predicated region
      $region48: #{tpu_custom_call.1} parent=5 // pred_check
        %p331 = pneg %p330
      $region49: #{tpu_custom_call.1} parent=5 // pred_check_branch
        %333 = sbr.rel (%p331) target = $region51
      $region50: #{tpu_custom_call.1} parent=5 // pred_region
        %s334 = ssub.s32 %s15, 2
        // Predicated region
        $region52: #{tpu_custom_call.1} parent=50 // pred_check
          %p335 = pneg %p112
        $region53: #{tpu_custom_call.1} parent=50 // pred_check_branch
          %337 = sbr.rel (%p335) target = $region55
        $region54: #{tpu_custom_call.1} parent=50 // pred_region
          %s338 = sand.u32 %s97, 1
          %s339 = scalar_lea.sflag [#allocation4], %s338
          %s340 = sand.u32 %s97, 1
          %s341 = smul.addr %s340, 32
          %s342 = scalar_lea.vmem [#allocation5], %s341
          %343 = dma.done %s339, 512
        $region55: #{tpu_custom_call.1} parent=50 // pred_fallthru
          _
      $region51: #{tpu_custom_call.1} parent=5 // pred_fallthru
        _
    $region6: #{tpu_custom_call.1} parent=1 // loop_footer
      %s19 = sadd.s32 1, %s15
    $region7: #{tpu_custom_call.1} parent=1 // loop_footer_branch
      %14 = sbr.rel target = $region3
    $region8: #{tpu_custom_call.1} parent=1 // loop_exit
      _
    %344 = vsyncpa [#allocation3], 1
    %s345 = scalar_lea.sflag [#allocation3], 1
    %346 = vsyncpa %s345, 1
    %347 = vsyncpa [#allocation4], 1
    %s348 = scalar_lea.sflag [#allocation4], 1
    %349 = vsyncpa %s348, 1

</llo_original>
